<compile_context>
chip_gen: v5e
topology: v5e:2x2
jax: 0.10.0
libtpu: 0.0.40
codegen_flags: <defaults>
</compile_context>

<pallas_src>
import functools

import jax
import jax.numpy as jnp
from jax.experimental import pallas as pl
from jax.experimental.pallas import tpu as pltpu

IN_DIM = 20
HID_DIM = 10
OUT_DIM = 5
LANE = 128  # TPU lane width; batch tiles are multiples of this.

# Per-batch-column VMEM footprint: double-buffered x (20*4*2) + out (5*4*2) tiles
# plus f32 temps for x/h/y (~(20+10+5)*4)  ->  ~340 B/col.
MAX_TB = 128 * 1024              # ~44 MiB footprint worst case, fits the limit below
VMEM_LIMIT_BYTES = 48 * 1024 * 1024  # within v7x's 64 MiB physical VMEM, generous on v5e/v6e


def mlp_kernel(x_ref, w1_ref, b1_ref, w2_ref, b2_ref, o_ref):
    # x_ref: (IN_DIM, TB) feature-major tile (batch on the lane axis).
    # Weights/biases use constant index_maps -> VMEM-resident across the grid.
    x = x_ref[...]                                                       # (20, TB) f32
    h = jnp.dot(w1_ref[...], x, preferred_element_type=jnp.float32) + b1_ref[...]
    h = jax.nn.sigmoid(h)                                                # (10, TB), EUP
    y = jnp.dot(w2_ref[...], h, preferred_element_type=jnp.float32) + b2_ref[...]
    o_ref[...] = jax.nn.sigmoid(y).astype(o_ref.dtype)                   # (5, TB)


def _pick_batch_tile(B, tb):
    """Lane-aligned batch tile: as large as requested (VMEM-capped), but capped at
    ~half the batch so there are >= 2 grid steps whenever B > LANE (lets the
    "parallel" batch axis shard across v7x's two TensorCores)."""
    tb = max(LANE, min(int(tb), MAX_TB))
    tb = (tb // LANE) * LANE
    half = pl.cdiv(pl.cdiv(B, 2), LANE) * LANE
    return max(LANE, min(tb, half))


@functools.partial(jax.jit, static_argnames=("tb", "feature_major_out"))
def diy_model_forward(x, w1, b1, w2, b2, *, tb=32768, feature_major_out=False):
    """DIYModel forward: sigmoid(sigmoid(x @ W1.T + b1) @ W2.T + b2).

    x: (B, 20) f32; w1: (10, 20); b1: (10,); w2: (5, 10); b2: (5,)  (nn.Linear layout).
    Returns (B, 5), or (5, B) if feature_major_out=True (skips the final transpose
    for callers that can consume feature-major activations).
    """
    B = x.shape[0]
    TB = _pick_batch_tile(B, tb)
    n_tiles = pl.cdiv(B, TB)   # partial last block is masked by Pallas (no jnp.pad)

    # Feature-major view of x. With allow_input_fusion XLA may fuse this transpose
    # into the pallas_call's input DMA instead of materializing an extra HBM copy.
    xT = x.T.astype(jnp.float32)                       # (20, B)
    b1c = b1.reshape(HID_DIM, 1).astype(jnp.float32)
    b2c = b2.reshape(OUT_DIM, 1).astype(jnp.float32)

    cost = pl.CostEstimate(
        flops=2 * B * (IN_DIM * HID_DIM + HID_DIM * OUT_DIM),
        transcendentals=B * (HID_DIM + OUT_DIM),
        bytes_accessed=4 * (B * (IN_DIM + OUT_DIM)
                            + HID_DIM * (IN_DIM + 1)
                            + OUT_DIM * (HID_DIM + 1)),
    )

    outT = pl.pallas_call(
        mlp_kernel,
        out_shape=jax.ShapeDtypeStruct((OUT_DIM, B), jnp.float32),
        grid=(n_tiles,),
        in_specs=[
            pl.BlockSpec((IN_DIM, TB), lambda i: (0, i)),        # x tiles stream
            pl.BlockSpec((HID_DIM, IN_DIM), lambda i: (0, 0)),   # W1 resident
            pl.BlockSpec((HID_DIM, 1), lambda i: (0, 0)),        # b1 resident
            pl.BlockSpec((OUT_DIM, HID_DIM), lambda i: (0, 0)),  # W2 resident
            pl.BlockSpec((OUT_DIM, 1), lambda i: (0, 0)),        # b2 resident
        ],
        out_specs=pl.BlockSpec((OUT_DIM, TB), lambda i: (0, i)),
        compiler_params=pltpu.CompilerParams(
            dimension_semantics=("parallel",),                   # megacore on v7x
            vmem_limit_bytes=VMEM_LIMIT_BYTES,
            allow_input_fusion=[True, False, False, False, False],
        ),
        cost_estimate=cost,
    )(xT, w1.astype(jnp.float32), b1c, w2.astype(jnp.float32), b2c)

    if feature_major_out:
        return outT                                              # (5, B), no extra pass
    return outT.T                                                # (B, 5) nn.Module layout


if __name__ == "__main__":
    key = jax.random.PRNGKey(0)
    k_x, k_w1, k_b1, k_w2, k_b2 = jax.random.split(key, 5)

    # Small but grid-exercising batch: B=200 -> two 128-wide tiles, the second partial
    # (exercises the un-padded masked last block).
    B = 200
    x = jax.random.normal(k_x, (B, IN_DIM), dtype=jnp.float32)

    # Deterministic "synthetic checkpoint", PyTorch nn.Linear init + [out, in] layout.
    bound1 = 1.0 / jnp.sqrt(IN_DIM)
    bound2 = 1.0 / jnp.sqrt(HID_DIM)
    w1 = jax.random.uniform(k_w1, (HID_DIM, IN_DIM), jnp.float32, -bound1, bound1)
    b1 = jax.random.uniform(k_b1, (HID_DIM,), jnp.float32, -bound1, bound1)
    w2 = jax.random.uniform(k_w2, (OUT_DIM, HID_DIM), jnp.float32, -bound2, bound2)
    b2 = jax.random.uniform(k_b2, (OUT_DIM,), jnp.float32, -bound2, bound2)

    out = diy_model_forward(x, w1, b1, w2, b2)
    out = jax.block_until_ready(out)

    # Plain-JAX reference with PyTorch nn.Linear semantics: y = x @ W.T + b.
    ref = jax.nn.sigmoid(x @ w1.T + b1)
    ref = jax.nn.sigmoid(ref @ w2.T + b2)
    assert out.shape == (B, OUT_DIM)
    assert jnp.allclose(out, ref, atol=1e-5, rtol=1e-5)

    print("KERNEL_OK")
</pallas_src>

<mosaic_0001>
module attributes {stable_mosaic.version = 11 : i64} {
  func.func @mlp_kernel(%arg0: i32, %arg1: memref<20x128xf32, #tpu.memory_space<vmem>>, %arg2: memref<10x20xf32, #tpu.memory_space<vmem>>, %arg3: memref<10x1xf32, #tpu.memory_space<vmem>>, %arg4: memref<5x10xf32, #tpu.memory_space<vmem>>, %arg5: memref<5x1xf32, #tpu.memory_space<vmem>>, %arg6: memref<5x128xf32, #tpu.memory_space<vmem>>) attributes {dimension_semantics = [#tpu.dimension_semantics<parallel>], iteration_bounds = array<i64: 2>, scalar_prefetch = 0 : i64, scratch_operands = 0 : i64, tpu.core_type = #tpu.core_type<tc>, window_params = [{transform_indices = @transform_0, window_bounds = array<i64: 20, 128>}, {pipeline_mode = #tpu.pipeline_mode<synchronous>, transform_indices = @transform_1, window_bounds = array<i64: 10, 20>}, {pipeline_mode = #tpu.pipeline_mode<synchronous>, transform_indices = @transform_2, window_bounds = array<i64: 10, 1>}, {pipeline_mode = #tpu.pipeline_mode<synchronous>, transform_indices = @transform_3, window_bounds = array<i64: 5, 10>}, {pipeline_mode = #tpu.pipeline_mode<synchronous>, transform_indices = @transform_4, window_bounds = array<i64: 5, 1>}, {transform_indices = @transform_5, window_bounds = array<i64: 5, 128>}]} {
    %c0 = arith.constant 0 : index
    %c0_0 = arith.constant 0 : index
    %0 = vector.load %arg1[%c0, %c0_0] : memref<20x128xf32, #tpu.memory_space<vmem>>, vector<20x128xf32>
    %c0_1 = arith.constant 0 : index
    %c0_2 = arith.constant 0 : index
    %1 = vector.load %arg2[%c0_1, %c0_2] : memref<10x20xf32, #tpu.memory_space<vmem>>, vector<10x20xf32>
    %cst = arith.constant dense<0.000000e+00> : vector<10x128xf32>
    %2 = tpu.matmul %1, %0, %cst {dimension_numbers = #tpu.dot_dimension_numbers<[1], [0], [0], [1], [0, 0, 1, 1], [], []>} : vector<10x20xf32>, vector<20x128xf32>, vector<10x128xf32> -> vector<10x128xf32>
    %c0_3 = arith.constant 0 : index
    %c0_4 = arith.constant 0 : index
    %3 = vector.load %arg3[%c0_3, %c0_4] : memref<10x1xf32, #tpu.memory_space<vmem>>, vector<10x1xf32>
    %4 = vector.broadcast %3 : vector<10x1xf32> to vector<10x128xf32>
    %5 = arith.addf %2, %4 : vector<10x128xf32>
    %6 = arith.negf %5 : vector<10x128xf32>
    %7 = math.exp %6 : vector<10x128xf32>
    %cst_5 = arith.constant 1.000000e+00 : f32
    %8 = vector.broadcast %cst_5 : f32 to vector<10x128xf32>
    %9 = arith.addf %8, %7 : vector<10x128xf32>
    %10 = arith.divf %8, %9 : vector<10x128xf32>
    %c0_6 = arith.constant 0 : index
    %c0_7 = arith.constant 0 : index
    %11 = vector.load %arg4[%c0_6, %c0_7] : memref<5x10xf32, #tpu.memory_space<vmem>>, vector<5x10xf32>
    %cst_8 = arith.constant dense<0.000000e+00> : vector<5x128xf32>
    %12 = tpu.matmul %11, %10, %cst_8 {dimension_numbers = #tpu.dot_dimension_numbers<[1], [0], [0], [1], [0, 0, 1, 1], [], []>} : vector<5x10xf32>, vector<10x128xf32>, vector<5x128xf32> -> vector<5x128xf32>
    %c0_9 = arith.constant 0 : index
    %c0_10 = arith.constant 0 : index
    %13 = vector.load %arg5[%c0_9, %c0_10] : memref<5x1xf32, #tpu.memory_space<vmem>>, vector<5x1xf32>
    %14 = vector.broadcast %13 : vector<5x1xf32> to vector<5x128xf32>
    %15 = arith.addf %12, %14 : vector<5x128xf32>
    %16 = arith.negf %15 : vector<5x128xf32>
    %17 = math.exp %16 : vector<5x128xf32>
    %cst_11 = arith.constant 1.000000e+00 : f32
    %18 = vector.broadcast %cst_11 : f32 to vector<5x128xf32>
    %19 = arith.addf %18, %17 : vector<5x128xf32>
    %20 = arith.divf %18, %19 : vector<5x128xf32>
    %c0_12 = arith.constant 0 : index
    %c0_13 = arith.constant 0 : index
    %21 = vector.load %arg6[%c0_12, %c0_13] : memref<5x128xf32, #tpu.memory_space<vmem>>, vector<5x128xf32>
    tpu.vector_store %arg6[%c0_12, %c0_13], %20 {strides = array<i32>} : memref<5x128xf32, #tpu.memory_space<vmem>>, vector<5x128xf32>,
    return
  }
  func.func @transform_0(%arg0: i32) -> (i32, i32) {
    %c0_i32 = arith.constant 0 : i32
    %c0_i32_0 = arith.constant 0 : i32
    return %c0_i32, %arg0 : i32, i32
  }
  func.func @transform_1(%arg0: i32) -> (i32, i32) {
    %c0_i32 = arith.constant 0 : i32
    %c0_i32_0 = arith.constant 0 : i32
    %c0_i32_1 = arith.constant 0 : i32
    return %c0_i32, %c0_i32_0 : i32, i32
  }
  func.func @transform_2(%arg0: i32) -> (i32, i32) {
    %c0_i32 = arith.constant 0 : i32
    %c0_i32_0 = arith.constant 0 : i32
    %c0_i32_1 = arith.constant 0 : i32
    return %c0_i32, %c0_i32_0 : i32, i32
  }
  func.func @transform_3(%arg0: i32) -> (i32, i32) {
    %c0_i32 = arith.constant 0 : i32
    %c0_i32_0 = arith.constant 0 : i32
    %c0_i32_1 = arith.constant 0 : i32
    return %c0_i32, %c0_i32_0 : i32, i32
  }
  func.func @transform_4(%arg0: i32) -> (i32, i32) {
    %c0_i32 = arith.constant 0 : i32
    %c0_i32_0 = arith.constant 0 : i32
    %c0_i32_1 = arith.constant 0 : i32
    return %c0_i32, %c0_i32_0 : i32, i32
  }
  func.func @transform_5(%arg0: i32) -> (i32, i32) {
    %c0_i32 = arith.constant 0 : i32
    %c0_i32_0 = arith.constant 0 : i32
    return %c0_i32, %arg0 : i32, i32
  }
}

</mosaic_0001>

<llo_original>
// kernel: diy_model_forward.2
$region0: #{diy_model_forward.2}
  #allocation0 [shape = 'u32[]', space=smem, size = 0x4, offset = 0x4, fixed_abs, tag = 'smem constant byte address 0x4 - core index']
  #allocation1 [shape = 'u32[72,128]{1,0:T(1,128)}', space=vmem, size = 0x9000, scoped, tag = 'internal scratch']
  %s0 = inlined_call_operand.vmem [shape: f32[10,20], index: 0, kind: input, shape index: {}]
  %s1 = inlined_call_operand.vmem [shape: f32[10,1], index: 1, kind: input, shape index: {}]
  %s2 = inlined_call_operand.vmem [shape: f32[5,10], index: 2, kind: input, shape index: {}]
  %s3 = inlined_call_operand.vmem [shape: f32[5,1], index: 3, kind: input, shape index: {}]
  %s4 = inlined_call_operand.vmem [shape: f32[200,20], index: 4, kind: input, shape index: {}]
  %s5 = inlined_call_operand.hbm [shape: f32[5,200], index: 5, kind: output, shape index: {}]
  %s6 = sld [smem:[#allocation0]]
  $region53: #{diy_model_forward.2} parent=0
    _
  %s8 = ssub.s32 1, %s6
  %s9 = scalar_select 0, %s8, %s6
  $region1: #{diy_model_forward.2} parent=0
    #allocation2 [shape = 'u8[8192]{0}', space=vmem, size = 0x2000, scoped, tag = 'output window, operand 0']
    #allocation3 [shape = 's32[2]{0}', space=sflag, size = 0x8, scoped, tag = 'scoped memory for diy_model_forward.2']
    %10 = vsyncpa [#allocation3], 0
    %s11 = scalar_lea.sflag [#allocation3], 1
    %12 = vsyncpa %s11, 0
    loop: start=0, step=1, limit=4
    $region2: #{diy_model_forward.2} parent=1 // loop_pre_header
      _
    $region3: #{diy_model_forward.2} parent=1 // loop_header
      %s14 = sphi 0, %s18
      %p15 = scmp.ge.s32.totalorder %s14, 4
      %s24 = sphi 0, %s26
      %s27 = sphi 0, %s24
      %s28 = sphi 0, %s27
      %s44 = sphi 0, %s28
      %s48 = sphi 0, %s48
      %s50 = sphi 0, %s48
      %s51 = sphi 0, %s50
      %s65 = sphi 0, %s51
      %s69 = sphi 0, %s69
      %s71 = sphi 0, %s69
      %s72 = sphi 0, %s71
      %s86 = sphi 0, %s72
      %s90 = sphi 0, %s90
      %s92 = sphi 0, %s90
      %s93 = sphi 0, %s92
      %s107 = sphi 0, %s93
      %s111 = sphi 0, %s111
      %s113 = sphi 0, %s111
      %s114 = sphi 0, %s113
      %s128 = sphi 0, %s114
      %s134 = sphi 0, %s136
      %s137 = sphi 0, %s134
      %s138 = sphi 0, %s137
      %s154 = sphi 0, %s138
    $region4: #{diy_model_forward.2} parent=1 // loop_header_branch
      %17 = sbr.rel (%p15) target = $region8
    $region5: #{diy_model_forward.2} parent=1 // loop_body
      %s19 = ssub.s32 %s14, 1
      %s20 = ssub.s32 %s14, 2
      %s21 = sadd.s32 %s14, 1
      %s22 = ssub.s32 %s14, %s21
      %p23 = scmp.eq.s32.totalorder %s22, 0
      %s25 = sadd.s32 %s24, 1
      %s26 = scalar_select %p23, %s24, %s25
      %p29 = pneg %p23
      %p30 = scmp.eq.s32.totalorder %s14, 1
      %p31 = por %p29, %p30
      %p32 = scmp.ne.s32.totalorder %s24, %s27
      %p33 = scmp.eq.s32.totalorder %s14, 0
      %p34 = por %p32, %p33
      %p35 = scmp.ne.s32.totalorder %s24, %s27
      %p36 = scmp.eq.s32.totalorder %s19, 1
      %p37 = por %p35, %p36
      %p38 = scmp.ne.s32.totalorder %s27, %s28
      %p39 = scmp.eq.s32.totalorder %s19, 0
      %p40 = por %p38, %p39
      %p41 = scmp.ne.s32.totalorder %s27, %s28
      %p42 = scmp.eq.s32.totalorder %s20, 1
      %p43 = por %p41, %p42
      %p45 = scmp.ne.s32.totalorder %s28, %s44
      %p46 = scmp.eq.s32.totalorder %s20, 0
      %p47 = por %p45, %p46
      %s49 = sadd.s32 %s48, 1
      %p52 = scmp.eq.s32.totalorder %s14, 1
      %p53 = scmp.ne.s32.totalorder %s48, %s50
      %p54 = scmp.eq.s32.totalorder %s14, 0
      %p55 = por %p53, %p54
      %p56 = scmp.ne.s32.totalorder %s48, %s50
      %p57 = scmp.eq.s32.totalorder %s19, 1
      %p58 = por %p56, %p57
      %p59 = scmp.ne.s32.totalorder %s50, %s51
      %p60 = scmp.eq.s32.totalorder %s19, 0
      %p61 = por %p59, %p60
      %p62 = scmp.ne.s32.totalorder %s50, %s51
      %p63 = scmp.eq.s32.totalorder %s20, 1
      %p64 = por %p62, %p63
      %p66 = scmp.ne.s32.totalorder %s51, %s65
      %p67 = scmp.eq.s32.totalorder %s20, 0
      %p68 = por %p66, %p67
      %s70 = sadd.s32 %s69, 1
      %p73 = scmp.eq.s32.totalorder %s14, 1
      %p74 = scmp.ne.s32.totalorder %s69, %s71
      %p75 = scmp.eq.s32.totalorder %s14, 0
      %p76 = por %p74, %p75
      %p77 = scmp.ne.s32.totalorder %s69, %s71
      %p78 = scmp.eq.s32.totalorder %s19, 1
      %p79 = por %p77, %p78
      %p80 = scmp.ne.s32.totalorder %s71, %s72
      %p81 = scmp.eq.s32.totalorder %s19, 0
      %p82 = por %p80, %p81
      %p83 = scmp.ne.s32.totalorder %s71, %s72
      %p84 = scmp.eq.s32.totalorder %s20, 1
      %p85 = por %p83, %p84
      %p87 = scmp.ne.s32.totalorder %s72, %s86
      %p88 = scmp.eq.s32.totalorder %s20, 0
      %p89 = por %p87, %p88
      %s91 = sadd.s32 %s90, 1
      %p94 = scmp.eq.s32.totalorder %s14, 1
      %p95 = scmp.ne.s32.totalorder %s90, %s92
      %p96 = scmp.eq.s32.totalorder %s14, 0
      %p97 = por %p95, %p96
      %p98 = scmp.ne.s32.totalorder %s90, %s92
      %p99 = scmp.eq.s32.totalorder %s19, 1
      %p100 = por %p98, %p99
      %p101 = scmp.ne.s32.totalorder %s92, %s93
      %p102 = scmp.eq.s32.totalorder %s19, 0
      %p103 = por %p101, %p102
      %p104 = scmp.ne.s32.totalorder %s92, %s93
      %p105 = scmp.eq.s32.totalorder %s20, 1
      %p106 = por %p104, %p105
      %p108 = scmp.ne.s32.totalorder %s93, %s107
      %p109 = scmp.eq.s32.totalorder %s20, 0
      %p110 = por %p108, %p109
      %s112 = sadd.s32 %s111, 1
      %p115 = scmp.eq.s32.totalorder %s14, 1
      %p116 = scmp.ne.s32.totalorder %s111, %s113
      %p117 = scmp.eq.s32.totalorder %s14, 0
      %p118 = por %p116, %p117
      %p119 = scmp.ne.s32.totalorder %s111, %s113
      %p120 = scmp.eq.s32.totalorder %s19, 1
      %p121 = por %p119, %p120
      %p122 = scmp.ne.s32.totalorder %s113, %s114
      %p123 = scmp.eq.s32.totalorder %s19, 0
      %p124 = por %p122, %p123
      %p125 = scmp.ne.s32.totalorder %s113, %s114
      %p126 = scmp.eq.s32.totalorder %s20, 1
      %p127 = por %p125, %p126
      %p129 = scmp.ne.s32.totalorder %s114, %s128
      %p130 = scmp.eq.s32.totalorder %s20, 0
      %p131 = por %p129, %p130
      %s132 = ssub.s32 %s14, %s21
      %p133 = scmp.eq.s32.totalorder %s132, 0
      %s135 = sadd.s32 %s134, 1
      %s136 = scalar_select %p133, %s134, %s135
      %p139 = pneg %p133
      %p140 = scmp.eq.s32.totalorder %s14, 1
      %p141 = por %p139, %p140
      %p142 = scmp.ne.s32.totalorder %s134, %s137
      %p143 = scmp.eq.s32.totalorder %s14, 0
      %p144 = por %p142, %p143
      %p145 = scmp.ne.s32.totalorder %s134, %s137
      %p146 = scmp.eq.s32.totalorder %s19, 1
      %p147 = por %p145, %p146
      %p148 = scmp.ne.s32.totalorder %s137, %s138
      %p149 = scmp.eq.s32.totalorder %s19, 0
      %p150 = por %p148, %p149
      %p151 = scmp.ne.s32.totalorder %s137, %s138
      %p152 = scmp.eq.s32.totalorder %s20, 1
      %p153 = por %p151, %p152
      %p155 = scmp.ne.s32.totalorder %s138, %s154
      %p156 = scmp.eq.s32.totalorder %s20, 0
      %p157 = por %p155, %p156
      %p158 = scmp.le.s32.totalorder 1, %s14
      %p159 = scmp.lt.s32.totalorder %s14, 3
      %p160 = pnand %p158, %p159
      %p161 = pneg %p160
      // Predicated region
      $region9: #{diy_model_forward.2} parent=5 // pred_check
        _
      $region10: #{diy_model_forward.2} parent=5 // pred_check_branch
        %163 = sbr.rel (%p160) target = $region12
      $region11: #{diy_model_forward.2} parent=5 // pred_region
        %s164 = ssub.s32 %s14, 1
        // Predicated region
        $region13: #{diy_model_forward.2} parent=11 // pred_check
          %p165 = pneg %p61
        $region14: #{diy_model_forward.2} parent=11 // pred_check_branch
          %167 = sbr.rel (%p165) target = $region16
        $region15: #{diy_model_forward.2} parent=11 // pred_region
          _
        $region16: #{diy_model_forward.2} parent=11 // pred_fallthru
          _
        // Predicated region
        $region17: #{diy_model_forward.2} parent=11 // pred_check
          %p168 = pneg %p82
        $region18: #{diy_model_forward.2} parent=11 // pred_check_branch
          %170 = sbr.rel (%p168) target = $region20
        $region19: #{diy_model_forward.2} parent=11 // pred_region
          _
        $region20: #{diy_model_forward.2} parent=11 // pred_fallthru
          _
        // Predicated region
        $region21: #{diy_model_forward.2} parent=11 // pred_check
          %p171 = pneg %p103
        $region22: #{diy_model_forward.2} parent=11 // pred_check_branch
          %173 = sbr.rel (%p171) target = $region24
        $region23: #{diy_model_forward.2} parent=11 // pred_region
          _
        $region24: #{diy_model_forward.2} parent=11 // pred_fallthru
          _
        // Predicated region
        $region25: #{diy_model_forward.2} parent=11 // pred_check
          %p174 = pneg %p124
        $region26: #{diy_model_forward.2} parent=11 // pred_check_branch
          %176 = sbr.rel (%p174) target = $region28
        $region27: #{diy_model_forward.2} parent=11 // pred_region
          _
        $region28: #{diy_model_forward.2} parent=11 // pred_fallthru
          _
      $region12: #{diy_model_forward.2} parent=5 // pred_fallthru
        _
      %p177 = scmp.lt.s32.totalorder %s14, 2
      // Predicated region
      $region29: #{diy_model_forward.2} parent=5 // pred_check
        %p178 = pneg %p177
      $region30: #{diy_model_forward.2} parent=5 // pred_check_branch
        %180 = sbr.rel (%p178) target = $region32
      $region31: #{diy_model_forward.2} parent=5 // pred_region
        // Predicated region
        $region33: #{diy_model_forward.2} parent=31 // pred_check
          %p181 = pneg %p34
        $region34: #{diy_model_forward.2} parent=31 // pred_check_branch
          %183 = sbr.rel (%p181) target = $region36
        $region35: #{diy_model_forward.2} parent=31 // pred_region
          %p184 = scmp.lt.s32.totalorder %s14, 1
          %s185 = scalar_select %p184, %s14, 1
          %s186 = smul.addr %s185, 8
          %s187 = scalar_lea.vmem %s4, %s186
        $region36: #{diy_model_forward.2} parent=31 // pred_fallthru
          _
      $region32: #{diy_model_forward.2} parent=5 // pred_fallthru
        _
      %p188 = scmp.le.s32.totalorder 1, %s14
      %p189 = scmp.lt.s32.totalorder %s14, 3
      %p190 = pnand %p188, %p189
      %p191 = pneg %p190
      // Predicated region
      $region37: #{diy_model_forward.2} parent=5 // pred_check
        _
      $region38: #{diy_model_forward.2} parent=5 // pred_check_branch
        %193 = sbr.rel (%p190) target = $region40
      $region39: #{diy_model_forward.2} parent=5 // pred_region
        #allocation4 [shape = 'u8[12288]{0}', space=vmem, size = 0x3000, dematerialized = true, scoped, tag = 'FusionAdapter Buffer %fusion.1 = f32[20,200]{1,0:T(8,128)} fusion(%param_4.1), kind=kLoop, calls=%fused_computation.1.clone, metadata={op_name="jit(diy_model_forward)/transpose" stack_frame_id=7}']
        %s194 = ssub.s32 %s14, 1
        %p195 = scmp.lt.s32.totalorder %s19, 1
        %s196 = scalar_select %p195, %s19, 1
        %s197 = smul.addr %s196, 8
        %s198 = scalar_lea.vmem %s4, %s197
        %p199 = pneg %p40
        %p200 = pneg %p37
        %p201 = pneg %p61
        %p202 = pneg %p58
        %p203 = pneg %p82
        %p204 = pneg %p79
        %p205 = pneg %p103
        %p206 = pneg %p100
        %p207 = pneg %p124
        %p208 = pneg %p121
        %p209 = pneg %p150
        %p210 = pneg %p147
        %s211 = sand.u32 %s137, 1
        %s212 = scalar_lea.sflag [#allocation3], %s211
        %s213 = sand.u32 %s137, 1
        %s214 = smul.addr %s213, 8
        %s215 = scalar_lea.vmem [#allocation2], %s214
        %p216 = scmp.lt.s32.totalorder %s19, 1
        %s217 = scalar_select %p216, %s19, 1
        %s218 = smul.addr %s217, 8
        %s219 = scalar_lea.vmem %s4, %s218
        %v220 = vld [vmem:[%s219] sm:$0xff]
        %s222 = ssub.s32 256, 1
        %223 = vst [vmem:[#allocation4] sm:%s222] %v220
        %s224 = scalar_lea.vmem %s219, 16
        %v225 = vld [vmem:[%s224] sm:$0xff]
        %s226 = scalar_lea.vmem [#allocation4], 8
        %s228 = ssub.s32 256, 1
        %229 = vst [vmem:[%s226] sm:%s228] %v225
        %s230 = scalar_lea.vmem %s219, 32
        %v231 = vld [vmem:[%s230] sm:$0xff]
        %s232 = scalar_lea.vmem [#allocation4], 16
        %s234 = ssub.s32 256, 1
        %235 = vst [vmem:[%s232] sm:%s234] %v231
        %v236 = vld [vmem:[#allocation4] sm:$0xff]
        %v237 = vld [vmem:[#allocation4 + $0x8] sm:$0xff]
        %v238 = vld [vmem:[#allocation4 + $0x10] sm:$0xf]
        %v239 = vld [vmem:[%s0] sm:$0xff]
        %v240 = vld [vmem:[%s0 + $0x8] sm:$0x3]
        %v241 = vld [vmem:[%s1] sm:$0xff]
        %v242 = vld [vmem:[%s1 + $0x8] sm:$0x3]
        %244 = vset.pattern.permute.xlu0 0
        %245 = vperm.xlu0 %244, %v241
        %v246 = vpop.permute.xlu0 %245
        %249 = vset.pattern.permute.xlu0 0
        %250 = vperm.xlu0 %249, %v242
        %v251 = vpop.permute.xlu0 %250
        %vm253 = vcmask 162816
        %v255 = vsel %vm253, %v239, 0
        %v258 = vsel %vm253, %v240, 0
        %vm260 = vcmask 1043456
        %v262 = vsel %vm260, %v238, 0
        %264 = vmatpush.msra.mxu0 0.0
        %265 = vmatpush.msra.mxu0 0.0
        %266 = vmatpush.msra.mxu0 0.0
        %267 = vmatpush.msra.mxu0 0.0
        %268 = vmatpush.msra.mxu0 0.0
        %269 = vmatpush.msra.mxu0 0.0
        %270 = vmatpush.msra.mxu0 0.0
        %271 = vmatpush.msra.mxu0 0.0
        %272 = vmatpush.msra.mxu0 0.0
        %273 = vmatpush.msra.mxu0 0.0
        %274 = vmatpush.msra.mxu0 0.0
        %275 = vmatpush.msra.mxu0 0.0
        %276 = vmatpush.msra.mxu0 0.0
        %277 = vmatpush.msra.mxu0 %v262
        %278 = vmatpush.msra.mxu0 %v237
        %279 = vmatpush.msra.mxu0 %v236
        %280 = vmatmul.f32.gmra.mxu0 %v255
        %v281 = vpop.f32.mrf.mxu0
        %v282 = vadd.f32 %v246, %v281
        %283 = vmatmul.f32.gmra.mxu0 %v258
        %v284 = vpop.f32.mrf.mxu0
        %v285 = vadd.f32 %v251, %v284
        %286 = vdwg.mxu0
        %v287 = vxor.u32 %v282, 2147483648
        %v288 = vxor.u32 %v285, 2147483648
        %v289 = vmul.f32 %v287, 1.442695
        %v290 = vpow.pop %v289
        %v291 = vmul.f32 %v288, 1.442695
        %v292 = vpow.pop %v291
        %v293 = vadd.f32 %v290, 1.0
        %v294 = vadd.f32 %v292, 1.0
        %v295 = vrcp.pop %v293
        %v296 = vmul.f32 %v293, %v295
        %v297 = vsub.f32 1.0, %v296
        %v298 = vmul.f32 %v295, %v297
        %v299 = vadd.f32 %v295, %v298
        %vm300 = vweird.f32 %v293
        %vm301 = vweird.f32 %v295
        %vm302 = vmor %vm300, %vm301
        %v303 = vsel %vm302, %v295, %v299
        %v304 = vand.u32 2147483647, %v293
        %vm305 = vcmp.eq.f32.partialorder %v304, 8.507059e+37
        %v306 = vand.u32 %v293, 2147483648
        %v307 = vor.u32 1.1754944e-38, %v306
        %v308 = vsel %vm305, %v307, %v303
        %v309 = vmul.f32 1.0, %v308
        %v310 = vrcp.pop %v294
        %v311 = vmul.f32 %v294, %v310
        %v312 = vsub.f32 1.0, %v311
        %v313 = vmul.f32 %v310, %v312
        %v314 = vadd.f32 %v310, %v313
        %vm315 = vweird.f32 %v294
        %vm316 = vweird.f32 %v310
        %vm317 = vmor %vm315, %vm316
        %v318 = vsel %vm317, %v310, %v314
        %v319 = vand.u32 2147483647, %v294
        %vm320 = vcmp.eq.f32.partialorder %v319, 8.507059e+37
        %v321 = vand.u32 %v294, 2147483648
        %v322 = vor.u32 1.1754944e-38, %v321
        %v323 = vsel %vm320, %v322, %v318
        %v324 = vmul.f32 1.0, %v323
        %v325 = vld [vmem:[%s2] sm:$0x1f]
        %v326 = vld [vmem:[%s3] sm:$0x1f]
        %328 = vset.pattern.permute.xlu0 0
        %329 = vperm.xlu0 %328, %v326
        %v330 = vpop.permute.xlu0 %329
        %vm332 = vcmask 80896
        %v334 = vsel %vm332, %v325, 0
        %vm336 = vcmask 1041408
        %v338 = vsel %vm336, %v324, 0
        %340 = vmatpush.msra.mxu0 0.0
        %341 = vmatpush.msra.mxu0 0.0
        %342 = vmatpush.msra.mxu0 0.0
        %343 = vmatpush.msra.mxu0 0.0
        %344 = vmatpush.msra.mxu0 0.0
        %345 = vmatpush.msra.mxu0 0.0
        %346 = vmatpush.msra.mxu0 0.0
        %347 = vmatpush.msra.mxu0 0.0
        %348 = vmatpush.msra.mxu0 0.0
        %349 = vmatpush.msra.mxu0 0.0
        %350 = vmatpush.msra.mxu0 0.0
        %351 = vmatpush.msra.mxu0 0.0
        %352 = vmatpush.msra.mxu0 0.0
        %353 = vmatpush.msra.mxu0 0.0
        %354 = vmatpush.msra.mxu0 %v338
        %355 = vmatpush.msra.mxu0 %v309
        %356 = vmatmul.f32.gmra.mxu0 %v334
        %v357 = vpop.f32.mrf.mxu0
        %v358 = vadd.f32 %v330, %v357
        %359 = vdwg.mxu0
        %v360 = vxor.u32 %v358, 2147483648
        %v361 = vmul.f32 %v360, 1.442695
        %v362 = vpow.pop %v361
        %v363 = vadd.f32 %v362, 1.0
        %v364 = vrcp.pop %v363
        %v365 = vmul.f32 %v363, %v364
        %v366 = vsub.f32 1.0, %v365
        %v367 = vmul.f32 %v364, %v366
        %v368 = vadd.f32 %v364, %v367
        %vm369 = vweird.f32 %v363
        %vm370 = vweird.f32 %v364
        %vm371 = vmor %vm369, %vm370
        %v372 = vsel %vm371, %v364, %v368
        %v373 = vand.u32 2147483647, %v363
        %vm374 = vcmp.eq.f32.partialorder %v373, 8.507059e+37
        %v375 = vand.u32 %v363, 2147483648
        %v376 = vor.u32 1.1754944e-38, %v375
        %v377 = vsel %vm374, %v376, %v372
        %v378 = vmul.f32 1.0, %v377
        %379 = vst [vmem:[%s215] sm:$0x1f] %v378
        %s380 = sand.u32 %s137, 1
        %s381 = scalar_lea.sflag [#allocation3], %s380
        %s382 = sand.u32 %s137, 1
        %s383 = smul.addr %s382, 8
        %s384 = scalar_lea.vmem [#allocation2], %s383
        // Predicated region
        $region41: #{diy_model_forward.2} parent=39 // pred_check
          %p385 = pneg %p147
        $region42: #{diy_model_forward.2} parent=39 // pred_check_branch
          %387 = sbr.rel (%p385) target = $region44
        $region43: #{diy_model_forward.2} parent=39 // pred_region
          %389 = vsyncadd %s381, 0
          %s390 = smul.addr %s19, 8
          %s391 = scalar_lea.hbm %s5, %s390
          %s393 = sshll.u32 %s384, 4
          %s394 = int_to_ptr.vmem [resolvable:$true] %s393
          %s395 = sshll.u32 %s391, 4
          %s396 = int_to_ptr.hbm [resolvable:$true] %s395
          %398 = dma.vmem_to_hbm [thread:$0]  %s394, 128, %s396, %s381
        $region44: #{diy_model_forward.2} parent=39 // pred_fallthru
          _
      $region40: #{diy_model_forward.2} parent=5 // pred_fallthru
        _
      %p399 = scmp.le.s32.totalorder 2, %s14
      // Predicated region
      $region45: #{diy_model_forward.2} parent=5 // pred_check
        %p400 = pneg %p399
      $region46: #{diy_model_forward.2} parent=5 // pred_check_branch
        %402 = sbr.rel (%p400) target = $region48
      $region47: #{diy_model_forward.2} parent=5 // pred_region
        %s403 = ssub.s32 %s14, 2
        // Predicated region
        $region49: #{diy_model_forward.2} parent=47 // pred_check
          %p404 = pneg %p153
        $region50: #{diy_model_forward.2} parent=47 // pred_check_branch
          %406 = sbr.rel (%p404) target = $region52
        $region51: #{diy_model_forward.2} parent=47 // pred_region
          %s407 = sand.u32 %s138, 1
          %s408 = scalar_lea.sflag [#allocation3], %s407
          %s409 = sand.u32 %s138, 1
          %s410 = smul.addr %s409, 8
          %s411 = scalar_lea.vmem [#allocation2], %s410
          %413 = dma.done %s408, 128
        $region52: #{diy_model_forward.2} parent=47 // pred_fallthru
          _
      $region48: #{diy_model_forward.2} parent=5 // pred_fallthru
        _
    $region6: #{diy_model_forward.2} parent=1 // loop_footer
      %s18 = sadd.s32 1, %s14
    $region7: #{diy_model_forward.2} parent=1 // loop_footer_branch
      %13 = sbr.rel target = $region3
    $region8: #{diy_model_forward.2} parent=1 // loop_exit
      _
    %414 = vsyncpa [#allocation3], 1
    %s415 = scalar_lea.sflag [#allocation3], 1
    %416 = vsyncpa %s415, 1

</llo_original>
